<compile_context>
chip_gen: v7x
topology: tpu7x:2x2x1
jax: 0.10.0
libtpu: 0.0.40
codegen_flags: <defaults>
</compile_context>

<pallas_src>
import jax
import jax.numpy as jnp
from jax.experimental import pallas as pl
from jax.experimental.pallas import tpu as pltpu

MAX_DEPTH = 10.0  # opt.max_depth
LANES = 128
SUBLANES = 8
PIX_BLOCK = LANES * SUBLANES  # 1024


def _pick_rows(rows_total, cap=1024):
    """Largest divisor of rows_total that is a multiple of 8 and <= cap.

    cap=1024 rows -> 128K pixels per grid step: with f32 in (Cin=3) + 3 f32
    outs, double-buffered, that is ~6.3 MB of VMEM -- inside the default
    scoped VMEM on v5e (16 MiB), v6e (32 MiB) and v7x (32 MiB).
    """
    best = SUBLANES
    r = SUBLANES
    lim = min(rows_total, cap)
    while r <= lim:
        if rows_total % r == 0:
            best = r
        r += SUBLANES
    return best


def audiovisual_forward(inp, params):
    rgb_nchw = inp["img"]        # (B, Cin, H, W)
    audio = inp["audio"]         # (B, 2, F, T)
    depth_gt = inp["depth"]      # (B, 1, H, W)

    B, Cin, H, W = rgb_nchw.shape
    HW = H * W

    # Pad pixel count to a multiple of 8*128 so blocks are always (rows,128)
    # dense (no masked stores, no fallback giant tile).
    HW_pad = ((HW + PIX_BLOCK - 1) // PIX_BLOCK) * PIX_BLOCK
    rows_total = HW_pad // LANES
    R = _pick_rows(rows_total)
    n_tiles = rows_total // R

    # Contiguous reshape (no transpose); keep the input's native dtype -- no
    # standalone cast pass (it would cost more HBM traffic than it saves).
    rgb = rgb_nchw.reshape(B, Cin, HW)
    if HW_pad != HW:
        rgb = jnp.pad(rgb, ((0, 0), (0, 0), (0, HW_pad - HW)))
    rgb = rgb.reshape(B, Cin, rows_total, LANES)

    aud = audio.reshape(B, -1)

    # ---- audio branch (net_audio): tiny per-batch work, done in plain XLA ----
    audio_feat = aud @ params["w_af"] + params["b_af"]                      # (B, Cf)
    aud_att = (audio_feat @ params["w_aa"])[:, 0]                           # (B,)
    aud_depth = jax.nn.sigmoid(
        (audio_feat @ params["w_ad"] + params["b_ad"])[:, 0])               # (B,)
    aud_scal = jnp.stack([aud_att, aud_depth], axis=1).astype(jnp.float32)  # (B, 2)

    # ---- fold the linear per-pixel heads (depth logit + attention logit) ----
    # alpha_logit = rgb @ (w_if@w_ai + w_mf@w_am)
    #               + (b_if@w_ai + b_mf@w_am + b_att) + audio_feat@w_aa
    w_d = params["w_id"][:, 0]                                              # (Cin,)
    w_a = (params["w_if"] @ params["w_ai"]
           + params["w_mf"] @ params["w_am"])[:, 0]                         # (Cin,)
    b_d = params["b_id"][0, 0]
    b_a = (params["b_if"] @ params["w_ai"]
           + params["b_mf"] @ params["w_am"]
           + params["b_att"])[0, 0]
    wvec = jnp.concatenate(
        [w_d, w_a, jnp.stack([b_d, b_a])]).astype(jnp.float32)              # (2*Cin+2,)

    # ---- Pallas kernel: per-pixel VPU FMAs + sigmoid + attention blend ----
    def kernel(wvec_ref, auds_ref, rgb_ref, imgd_ref, pred_ref, att_ref):
        b = pl.program_id(0)
        # Bias broadcasts hoisted once per tile; (R,128) full-vreg shapes.
        d_logit = jnp.full((R, LANES), wvec_ref[2 * Cin], jnp.float32)
        a_logit = jnp.full((R, LANES),
                           wvec_ref[2 * Cin + 1] + auds_ref[b, 0], jnp.float32)
        for k in range(Cin):                     # static unroll; K=Cin stays on VPU
            xk = rgb_ref[0, k].astype(jnp.float32)        # (R, 128)
            d_logit = d_logit + wvec_ref[k] * xk
            a_logit = a_logit + wvec_ref[Cin + k] * xk

        img_depth = jax.nn.sigmoid(d_logit)      # (R, 128)
        alpha = jax.nn.sigmoid(a_logit)          # (R, 128)
        a_depth = auds_ref[b, 1]                 # per-batch scalar (already sigmoid)
        pred = alpha * a_depth + (1.0 - alpha) * img_depth

        imgd_ref[0, 0] = (img_depth * MAX_DEPTH).astype(imgd_ref.dtype)
        pred_ref[0, 0] = (pred * MAX_DEPTH).astype(pred_ref.dtype)
        att_ref[0, 0] = alpha.astype(att_ref.dtype)

    smem_spec = pl.BlockSpec(memory_space=pltpu.MemorySpace.SMEM)
    rgb_spec = pl.BlockSpec((1, Cin, R, LANES), lambda b, t: (b, 0, t, 0))
    out_spec = pl.BlockSpec((1, 1, R, LANES), lambda b, t: (b, 0, t, 0))
    out_shape = jax.ShapeDtypeStruct((B, 1, rows_total, LANES), jnp.float32)

    cost = pl.CostEstimate(
        flops=B * HW_pad * (4 * Cin + 8),
        transcendentals=2 * B * HW_pad,
        bytes_accessed=(rgb.size * rgb.dtype.itemsize
                        + 3 * B * HW_pad * 4
                        + wvec.size * 4 + aud_scal.size * 4),
    )

    imgd, pred, alpha = pl.pallas_call(
        kernel,
        grid=(B, n_tiles),
        in_specs=[smem_spec, smem_spec, rgb_spec],
        out_specs=[out_spec, out_spec, out_spec],
        out_shape=[out_shape, out_shape, out_shape],
        compiler_params=pltpu.CompilerParams(
            dimension_semantics=("parallel", "parallel")),
        cost_estimate=cost,
    )(wvec, aud_scal, rgb)

    def to_nchw(x):
        flat = x.reshape(B, 1, HW_pad)
        if HW_pad != HW:
            flat = flat[:, :, :HW]
        return flat.reshape(B, 1, H, W)

    # audio_depth is a per-batch constant map: broadcast in the wrapper instead
    # of burning an HBM write stream in the kernel.
    audio_depth_map = jnp.broadcast_to(
        (aud_depth * MAX_DEPTH)[:, None, None, None], (B, 1, H, W))

    return {
        "img_depth": to_nchw(imgd),
        "audio_depth": audio_depth_map,
        "depth_predicted": to_nchw(pred),
        "attention": to_nchw(alpha),
        "img": rgb_nchw,
        "audio": audio,
        "depth_gt": depth_gt,
    }


def reference_forward(inp, params):
    """Plain-JAX reference of the same synthetic nets (unfolded), for validation."""
    rgb_nchw = inp["img"].astype(jnp.float32)
    B, Cin, H, W = rgb_nchw.shape
    HW = H * W
    rgb = jnp.transpose(rgb_nchw.reshape(B, Cin, HW), (0, 2, 1))        # (B, HW, Cin)
    aud = inp["audio"].reshape(B, -1)

    img_feat = rgb @ params["w_if"] + params["b_if"]
    img_depth = jax.nn.sigmoid(rgb @ params["w_id"] + params["b_id"])
    mat_feat = rgb @ params["w_mf"] + params["b_mf"]
    a_feat = aud @ params["w_af"] + params["b_af"]                      # (B, Cf)
    a_feat_b = jnp.broadcast_to(a_feat[:, None, :], (B, HW, a_feat.shape[-1]))
    audio_depth = jax.nn.sigmoid(a_feat_b @ params["w_ad"] + params["b_ad"])
    logit = (img_feat @ params["w_ai"] + a_feat_b @ params["w_aa"]
             + mat_feat @ params["w_am"] + params["b_att"])
    alpha = jax.nn.sigmoid(logit)
    pred = alpha * audio_depth + (1.0 - alpha) * img_depth
    return {
        "img_depth": img_depth * MAX_DEPTH,
        "audio_depth": audio_depth * MAX_DEPTH,
        "depth_predicted": pred * MAX_DEPTH,
        "attention": alpha,
    }


def make_params(key, cin, ca, cf):
    ks = jax.random.split(key, 16)
    s = 0.1
    return {
        "w_if": s * jax.random.normal(ks[0], (cin, cf), jnp.float32),
        "b_if": s * jax.random.normal(ks[1], (1, cf), jnp.float32),
        "w_id": s * jax.random.normal(ks[2], (cin, 1), jnp.float32),
        "b_id": s * jax.random.normal(ks[3], (1, 1), jnp.float32),
        "w_mf": s * jax.random.normal(ks[4], (cin, cf), jnp.float32),
        "b_mf": s * jax.random.normal(ks[5], (1, cf), jnp.float32),
        "w_af": s * jax.random.normal(ks[6], (ca, cf), jnp.float32),
        "b_af": s * jax.random.normal(ks[7], (1, cf), jnp.float32),
        "w_ad": s * jax.random.normal(ks[8], (cf, 1), jnp.float32),
        "b_ad": s * jax.random.normal(ks[9], (1, 1), jnp.float32),
        "w_ai": s * jax.random.normal(ks[10], (cf, 1), jnp.float32),
        "w_aa": s * jax.random.normal(ks[11], (cf, 1), jnp.float32),
        "w_am": s * jax.random.normal(ks[12], (cf, 1), jnp.float32),
        "b_att": s * jax.random.normal(ks[13], (1, 1), jnp.float32),
    }


if __name__ == "__main__":
    B, Cin, H, W = 2, 3, 16, 16
    F_bins, T_frames = 16, 8
    Ca = 2 * F_bins * T_frames
    Cf = 32

    key = jax.random.PRNGKey(0)
    k_img, k_aud, k_depth, k_par = jax.random.split(key, 4)

    inp = {
        "img": jax.random.normal(k_img, (B, Cin, H, W), jnp.float32),
        "audio": jax.random.normal(k_aud, (B, 2, F_bins, T_frames), jnp.float32),
        "depth": jax.random.uniform(k_depth, (B, 1, H, W), jnp.float32),
    }
    params = make_params(k_par, Cin, Ca, Cf)

    out = jax.block_until_ready(audiovisual_forward(inp, params))

    # validate against plain-JAX reference of the (unfolded) synthetic model
    ref = reference_forward(inp, params)
    for name in ("img_depth", "audio_depth", "depth_predicted", "attention"):
        got = out[name].reshape(B, H * W)
        want = ref[name].reshape(B, H * W)
        assert jnp.allclose(got, want, rtol=1e-4, atol=1e-4), name

    print("KERNEL_OK")
</pallas_src>

<mosaic_0001>
module attributes {stable_mosaic.version = 11 : i64} {
  func.func @kernel(%arg0: i32, %arg1: i32, %arg2: memref<8xf32, #tpu.memory_space<smem>>, %arg3: memref<2x2xf32, #tpu.memory_space<smem>>, %arg4: memref<1x3x8x128xf32, #tpu.memory_space<vmem>>, %arg5: memref<1x1x8x128xf32, #tpu.memory_space<vmem>>, %arg6: memref<1x1x8x128xf32, #tpu.memory_space<vmem>>, %arg7: memref<1x1x8x128xf32, #tpu.memory_space<vmem>>) attributes {dimension_semantics = [#tpu.dimension_semantics<parallel>, #tpu.dimension_semantics<parallel>], iteration_bounds = array<i64: 2, 1>, scalar_prefetch = 0 : i64, scratch_operands = 0 : i64, tpu.core_type = #tpu.core_type<tc>, window_params = [{transform_indices = @transform_0, window_bounds = array<i64: 8>}, {transform_indices = @transform_1, window_bounds = array<i64: 2, 2>}, {transform_indices = @transform_2, window_bounds = array<i64: 1, 3, 8, 128>}, {transform_indices = @transform_3, window_bounds = array<i64: 1, 1, 8, 128>}, {transform_indices = @transform_4, window_bounds = array<i64: 1, 1, 8, 128>}, {transform_indices = @transform_5, window_bounds = array<i64: 1, 1, 8, 128>}]} {
    %c6 = arith.constant 6 : index
    %0 = memref.load %arg2[%c6] : memref<8xf32, #tpu.memory_space<smem>>
    %1 = vector.broadcast %0 : f32 to vector<8x128xf32>
    %c7 = arith.constant 7 : index
    %2 = memref.load %arg2[%c7] : memref<8xf32, #tpu.memory_space<smem>>
    %3 = arith.index_cast %arg0 : i32 to index
    %c0 = arith.constant 0 : index
    %4 = memref.load %arg3[%3, %c0] : memref<2x2xf32, #tpu.memory_space<smem>>
    %5 = arith.addf %2, %4 : f32
    %6 = vector.broadcast %5 : f32 to vector<8x128xf32>
    %c0_0 = arith.constant 0 : index
    %c0_1 = arith.constant 0 : index
    %c0_2 = arith.constant 0 : index
    %c0_3 = arith.constant 0 : index
    %7 = vector.load %arg4[%c0_0, %c0_1, %c0_2, %c0_3] : memref<1x3x8x128xf32, #tpu.memory_space<vmem>>, vector<1x1x8x128xf32>
    %8 = vector.shape_cast %7 : vector<1x1x8x128xf32> to vector<8x128xf32>
    %c0_4 = arith.constant 0 : index
    %9 = memref.load %arg2[%c0_4] : memref<8xf32, #tpu.memory_space<smem>>
    %10 = vector.broadcast %9 : f32 to vector<8x128xf32>
    %11 = arith.mulf %10, %8 : vector<8x128xf32>
    %12 = arith.addf %1, %11 : vector<8x128xf32>
    %c3 = arith.constant 3 : index
    %13 = memref.load %arg2[%c3] : memref<8xf32, #tpu.memory_space<smem>>
    %14 = vector.broadcast %13 : f32 to vector<8x128xf32>
    %15 = arith.mulf %14, %8 : vector<8x128xf32>
    %16 = arith.addf %6, %15 : vector<8x128xf32>
    %c0_5 = arith.constant 0 : index
    %c1 = arith.constant 1 : index
    %c0_6 = arith.constant 0 : index
    %c0_7 = arith.constant 0 : index
    %17 = vector.load %arg4[%c0_5, %c1, %c0_6, %c0_7] : memref<1x3x8x128xf32, #tpu.memory_space<vmem>>, vector<1x1x8x128xf32>
    %18 = vector.shape_cast %17 : vector<1x1x8x128xf32> to vector<8x128xf32>
    %c1_8 = arith.constant 1 : index
    %19 = memref.load %arg2[%c1_8] : memref<8xf32, #tpu.memory_space<smem>>
    %20 = vector.broadcast %19 : f32 to vector<8x128xf32>
    %21 = arith.mulf %20, %18 : vector<8x128xf32>
    %22 = arith.addf %12, %21 : vector<8x128xf32>
    %c4 = arith.constant 4 : index
    %23 = memref.load %arg2[%c4] : memref<8xf32, #tpu.memory_space<smem>>
    %24 = vector.broadcast %23 : f32 to vector<8x128xf32>
    %25 = arith.mulf %24, %18 : vector<8x128xf32>
    %26 = arith.addf %16, %25 : vector<8x128xf32>
    %c0_9 = arith.constant 0 : index
    %c2 = arith.constant 2 : index
    %c0_10 = arith.constant 0 : index
    %c0_11 = arith.constant 0 : index
    %27 = vector.load %arg4[%c0_9, %c2, %c0_10, %c0_11] : memref<1x3x8x128xf32, #tpu.memory_space<vmem>>, vector<1x1x8x128xf32>
    %28 = vector.shape_cast %27 : vector<1x1x8x128xf32> to vector<8x128xf32>
    %c2_12 = arith.constant 2 : index
    %29 = memref.load %arg2[%c2_12] : memref<8xf32, #tpu.memory_space<smem>>
    %30 = vector.broadcast %29 : f32 to vector<8x128xf32>
    %31 = arith.mulf %30, %28 : vector<8x128xf32>
    %32 = arith.addf %22, %31 : vector<8x128xf32>
    %c5 = arith.constant 5 : index
    %33 = memref.load %arg2[%c5] : memref<8xf32, #tpu.memory_space<smem>>
    %34 = vector.broadcast %33 : f32 to vector<8x128xf32>
    %35 = arith.mulf %34, %28 : vector<8x128xf32>
    %36 = arith.addf %26, %35 : vector<8x128xf32>
    %37 = arith.negf %32 : vector<8x128xf32>
    %38 = math.exp %37 : vector<8x128xf32>
    %cst = arith.constant 1.000000e+00 : f32
    %39 = vector.broadcast %cst : f32 to vector<8x128xf32>
    %40 = arith.addf %39, %38 : vector<8x128xf32>
    %41 = arith.divf %39, %40 : vector<8x128xf32>
    %42 = arith.negf %36 : vector<8x128xf32>
    %43 = math.exp %42 : vector<8x128xf32>
    %cst_13 = arith.constant 1.000000e+00 : f32
    %44 = vector.broadcast %cst_13 : f32 to vector<8x128xf32>
    %45 = arith.addf %44, %43 : vector<8x128xf32>
    %46 = arith.divf %44, %45 : vector<8x128xf32>
    %47 = arith.index_cast %arg0 : i32 to index
    %c1_14 = arith.constant 1 : index
    %48 = memref.load %arg3[%47, %c1_14] : memref<2x2xf32, #tpu.memory_space<smem>>
    %49 = vector.broadcast %48 : f32 to vector<8x128xf32>
    %50 = arith.mulf %46, %49 : vector<8x128xf32>
    %cst_15 = arith.constant 1.000000e+00 : f32
    %51 = vector.broadcast %cst_15 : f32 to vector<8x128xf32>
    %52 = arith.subf %51, %46 : vector<8x128xf32>
    %53 = arith.mulf %52, %41 : vector<8x128xf32>
    %54 = arith.addf %50, %53 : vector<8x128xf32>
    %cst_16 = arith.constant 1.000000e+01 : f32
    %55 = vector.broadcast %cst_16 : f32 to vector<8x128xf32>
    %56 = arith.mulf %41, %55 : vector<8x128xf32>
    %c0_17 = arith.constant 0 : index
    %c0_18 = arith.constant 0 : index
    %c0_19 = arith.constant 0 : index
    %c0_20 = arith.constant 0 : index
    %57 = vector.load %arg5[%c0_17, %c0_18, %c0_19, %c0_20] : memref<1x1x8x128xf32, #tpu.memory_space<vmem>>, vector<1x1x8x128xf32>
    %58 = vector.shape_cast %57 : vector<1x1x8x128xf32> to vector<8x128xf32>
    %59 = vector.shape_cast %56 : vector<8x128xf32> to vector<1x1x8x128xf32>
    tpu.vector_store %arg5[%c0_17, %c0_18, %c0_19, %c0_20], %59 {strides = array<i32>} : memref<1x1x8x128xf32, #tpu.memory_space<vmem>>, vector<1x1x8x128xf32>,
    %cst_21 = arith.constant 1.000000e+01 : f32
    %60 = vector.broadcast %cst_21 : f32 to vector<8x128xf32>
    %61 = arith.mulf %54, %60 : vector<8x128xf32>
    %c0_22 = arith.constant 0 : index
    %c0_23 = arith.constant 0 : index
    %c0_24 = arith.constant 0 : index
    %c0_25 = arith.constant 0 : index
    %62 = vector.load %arg6[%c0_22, %c0_23, %c0_24, %c0_25] : memref<1x1x8x128xf32, #tpu.memory_space<vmem>>, vector<1x1x8x128xf32>
    %63 = vector.shape_cast %62 : vector<1x1x8x128xf32> to vector<8x128xf32>
    %64 = vector.shape_cast %61 : vector<8x128xf32> to vector<1x1x8x128xf32>
    tpu.vector_store %arg6[%c0_22, %c0_23, %c0_24, %c0_25], %64 {strides = array<i32>} : memref<1x1x8x128xf32, #tpu.memory_space<vmem>>, vector<1x1x8x128xf32>,
    %c0_26 = arith.constant 0 : index
    %c0_27 = arith.constant 0 : index
    %c0_28 = arith.constant 0 : index
    %c0_29 = arith.constant 0 : index
    %65 = vector.load %arg7[%c0_26, %c0_27, %c0_28, %c0_29] : memref<1x1x8x128xf32, #tpu.memory_space<vmem>>, vector<1x1x8x128xf32>
    %66 = vector.shape_cast %65 : vector<1x1x8x128xf32> to vector<8x128xf32>
    %67 = vector.shape_cast %46 : vector<8x128xf32> to vector<1x1x8x128xf32>
    tpu.vector_store %arg7[%c0_26, %c0_27, %c0_28, %c0_29], %67 {strides = array<i32>} : memref<1x1x8x128xf32, #tpu.memory_space<vmem>>, vector<1x1x8x128xf32>,
    return
  }
  func.func @transform_0(%arg0: i32, %arg1: i32) -> i32 {
    %c0_i32 = arith.constant 0 : i32
    %c0_i32_0 = arith.constant 0 : i32
    return %c0_i32 : i32
  }
  func.func @transform_1(%arg0: i32, %arg1: i32) -> (i32, i32) {
    %c0_i32 = arith.constant 0 : i32
    %c0_i32_0 = arith.constant 0 : i32
    %c0_i32_1 = arith.constant 0 : i32
    return %c0_i32, %c0_i32_0 : i32, i32
  }
  func.func @transform_2(%arg0: i32, %arg1: i32) -> (i32, i32, i32, i32) {
    %c0_i32 = arith.constant 0 : i32
    %c0_i32_0 = arith.constant 0 : i32
    %c0_i32_1 = arith.constant 0 : i32
    return %arg0, %c0_i32, %arg1, %c0_i32_0 : i32, i32, i32, i32
  }
  func.func @transform_3(%arg0: i32, %arg1: i32) -> (i32, i32, i32, i32) {
    %c0_i32 = arith.constant 0 : i32
    %c0_i32_0 = arith.constant 0 : i32
    %c0_i32_1 = arith.constant 0 : i32
    return %arg0, %c0_i32, %arg1, %c0_i32_0 : i32, i32, i32, i32
  }
  func.func @transform_4(%arg0: i32, %arg1: i32) -> (i32, i32, i32, i32) {
    %c0_i32 = arith.constant 0 : i32
    %c0_i32_0 = arith.constant 0 : i32
    %c0_i32_1 = arith.constant 0 : i32
    return %arg0, %c0_i32, %arg1, %c0_i32_0 : i32, i32, i32, i32
  }
  func.func @transform_5(%arg0: i32, %arg1: i32) -> (i32, i32, i32, i32) {
    %c0_i32 = arith.constant 0 : i32
    %c0_i32_0 = arith.constant 0 : i32
    %c0_i32_1 = arith.constant 0 : i32
    return %arg0, %c0_i32, %arg1, %c0_i32_0 : i32, i32, i32, i32
  }
}

</mosaic_0001>

<llo_original>
// kernel: tpu_custom_call.1
$region0: #{tpu_custom_call.1}
  #allocation0 [shape = 'u32[]', space=smem, size = 0x4, offset = 0x4, fixed_abs, tag = 'smem constant byte address 0x4 - core index']
  #allocation1 [shape = 'u32[144,128]{1,0:T(1,128)}', space=vmem, size = 0x12000, scoped, tag = 'internal scratch']
  %s0 = inlined_call_operand.hbm [shape: f32[8], index: 0, kind: input, shape index: {}]
  %s1 = inlined_call_operand.vmem [shape: f32[2,2], index: 1, kind: input, shape index: {}]
  %s2 = inlined_call_operand.hbm [shape: f32[2,3,8,128], index: 2, kind: input, shape index: {}]
  %s3 = inlined_call_operand.hbm [shape: f32[2,1,8,128], index: 3, kind: output, shape index: {0}]
  %s4 = inlined_call_operand.hbm [shape: f32[2,1,8,128], index: 4, kind: output, shape index: {1}]
  %s5 = inlined_call_operand.hbm [shape: f32[2,1,8,128], index: 5, kind: output, shape index: {2}]
  %6 = xla_tuple %s3, %s4, %s5
  %s7 = sld [smem:[#allocation0]]
  $region73: #{tpu_custom_call.1} parent=0
    _
  %s9 = ssub.s32 1, %s7
  %s10 = scalar_select 0, %s9, %s7
  $region1: #{tpu_custom_call.1} parent=0
    #allocation2 [shape = 'u8[512]{0}', space=smem, size = 0x200, scoped, tag = 'input window, operand 0, single buffered']
    #allocation3 [shape = 's32[2]{0}', space=sflag, size = 0x8, scoped, tag = 'scoped memory for tpu_custom_call.1']
    #allocation4 [shape = 's32[2]{0}', space=sflag, size = 0x8, scoped, tag = 'scoped memory for tpu_custom_call.1']
    #allocation5 [shape = 's32[2]{0}', space=sflag, size = 0x8, scoped, tag = 'scoped memory for tpu_custom_call.1']
    #allocation6 [shape = 's32[2]{0}', space=sflag, size = 0x8, scoped, tag = 'scoped memory for tpu_custom_call.1']
    #allocation7 [shape = 'u8[1024]{0}', space=smem, size = 0x400, scoped, tag = 'input window, operand 1, single buffered']
    #allocation8 [shape = 'u8[24576]{0}', space=vmem, size = 0x6000, scoped, tag = 'input window, operand 2']
    #allocation9 [shape = 'u8[8192]{0}', space=vmem, size = 0x2000, scoped, tag = 'output window, operand 0']
    #allocation10 [shape = 'u8[8192]{0}', space=vmem, size = 0x2000, scoped, tag = 'output window, operand 1']
    #allocation11 [shape = 's32[2]{0}', space=sflag, size = 0x8, scoped, tag = 'scoped memory for tpu_custom_call.1']
    #allocation12 [shape = 'u8[8192]{0}', space=vmem, size = 0x2000, scoped, tag = 'output window, operand 2']
    %11 = vsyncpa [#allocation5], 0
    %12 = vsyncpa [#allocation6], 0
    %13 = vsyncpa [#allocation3], 0
    %s14 = scalar_lea.sflag [#allocation3], 1
    %15 = vsyncpa %s14, 0
    %16 = vsyncpa [#allocation4], 0
    %s17 = scalar_lea.sflag [#allocation4], 1
    %18 = vsyncpa %s17, 0
    %19 = vsyncpa [#allocation11], 0
    %s20 = scalar_lea.sflag [#allocation11], 1
    %21 = vsyncpa %s20, 0
    loop: start=0, step=1, limit=4
    $region2: #{tpu_custom_call.1} parent=1 // loop_pre_header
      _
    $region3: #{tpu_custom_call.1} parent=1 // loop_header
      %s23 = sphi 0, %s27
      %p24 = scmp.ge.s32.totalorder %s23, 4
      %s30 = sphi 0, %s42
      %s31 = sphi 0, %s38
      %s32 = sphi 0, %s30
      %s33 = sphi 0, %s31
      %s34 = sphi 0, %s32
      %s35 = sphi 0, %s33
      %s43 = sphi 0, %s43
      %s45 = sphi 0, %s43
      %s46 = sphi 0, %s45
      %s60 = sphi 0, %s46
      %s64 = sphi 0, %s64
      %s66 = sphi 0, %s64
      %s67 = sphi 0, %s66
      %s81 = sphi 0, %s67
      %s89 = sphi 0, %s91
      %s92 = sphi 0, %s89
      %s93 = sphi 0, %s92
      %s109 = sphi 0, %s93
      %s117 = sphi 0, %s119
      %s120 = sphi 0, %s117
      %s121 = sphi 0, %s120
      %s137 = sphi 0, %s121
      %s145 = sphi 0, %s147
      %s148 = sphi 0, %s145
      %s149 = sphi 0, %s148
      %s165 = sphi 0, %s149
      %s173 = sphi 0, %s175
      %s176 = sphi 0, %s173
      %s177 = sphi 0, %s176
      %s193 = sphi 0, %s177
    $region4: #{tpu_custom_call.1} parent=1 // loop_header_branch
      %26 = sbr.rel (%p24) target = $region8
    $region5: #{tpu_custom_call.1} parent=1 // loop_body
      %s28 = ssub.s32 %s23, 1
      %s29 = ssub.s32 %s23, 2
      %s36 = sadd.s32 1, %s31
      %p37 = scmp.ge.s32.totalorder %s36, 1
      %s38 = scalar_select %p37, 0, %s36
      %s39 = sadd.s32 1, %s30
      %s40 = scalar_select %p37, %s39, %s30
      %p41 = scmp.ge.s32.totalorder %s40, 2
      %s42 = scalar_select %p41, 0, %s40
      %s44 = sadd.s32 %s43, 1
      %p47 = scmp.eq.s32.totalorder %s23, 1
      %p48 = scmp.ne.s32.totalorder %s43, %s45
      %p49 = scmp.eq.s32.totalorder %s23, 0
      %p50 = por %p48, %p49
      %p51 = scmp.ne.s32.totalorder %s43, %s45
      %p52 = scmp.eq.s32.totalorder %s28, 1
      %p53 = por %p51, %p52
      %p54 = scmp.ne.s32.totalorder %s45, %s46
      %p55 = scmp.eq.s32.totalorder %s28, 0
      %p56 = por %p54, %p55
      %p57 = scmp.ne.s32.totalorder %s45, %s46
      %p58 = scmp.eq.s32.totalorder %s29, 1
      %p59 = por %p57, %p58
      %p61 = scmp.ne.s32.totalorder %s46, %s60
      %p62 = scmp.eq.s32.totalorder %s29, 0
      %p63 = por %p61, %p62
      %s65 = sadd.s32 %s64, 1
      %p68 = scmp.eq.s32.totalorder %s23, 1
      %p69 = scmp.ne.s32.totalorder %s64, %s66
      %p70 = scmp.eq.s32.totalorder %s23, 0
      %p71 = por %p69, %p70
      %p72 = scmp.ne.s32.totalorder %s64, %s66
      %p73 = scmp.eq.s32.totalorder %s28, 1
      %p74 = por %p72, %p73
      %p75 = scmp.ne.s32.totalorder %s66, %s67
      %p76 = scmp.eq.s32.totalorder %s28, 0
      %p77 = por %p75, %p76
      %p78 = scmp.ne.s32.totalorder %s66, %s67
      %p79 = scmp.eq.s32.totalorder %s29, 1
      %p80 = por %p78, %p79
      %p82 = scmp.ne.s32.totalorder %s67, %s81
      %p83 = scmp.eq.s32.totalorder %s29, 0
      %p84 = por %p82, %p83
      %s85 = ssub.s32 %s30, %s42
      %s86 = ssub.s32 %s31, %s38
      %s87 = sor.u32 %s85, %s86
      %p88 = scmp.eq.s32.totalorder %s87, 0
      %s90 = sadd.s32 %s89, 1
      %s91 = scalar_select %p88, %s89, %s90
      %p94 = pneg %p88
      %p95 = scmp.eq.s32.totalorder %s23, 1
      %p96 = por %p94, %p95
      %p97 = scmp.ne.s32.totalorder %s89, %s92
      %p98 = scmp.eq.s32.totalorder %s23, 0
      %p99 = por %p97, %p98
      %p100 = scmp.ne.s32.totalorder %s89, %s92
      %p101 = scmp.eq.s32.totalorder %s28, 1
      %p102 = por %p100, %p101
      %p103 = scmp.ne.s32.totalorder %s92, %s93
      %p104 = scmp.eq.s32.totalorder %s28, 0
      %p105 = por %p103, %p104
      %p106 = scmp.ne.s32.totalorder %s92, %s93
      %p107 = scmp.eq.s32.totalorder %s29, 1
      %p108 = por %p106, %p107
      %p110 = scmp.ne.s32.totalorder %s93, %s109
      %p111 = scmp.eq.s32.totalorder %s29, 0
      %p112 = por %p110, %p111
      %s113 = ssub.s32 %s30, %s42
      %s114 = ssub.s32 %s31, %s38
      %s115 = sor.u32 %s113, %s114
      %p116 = scmp.eq.s32.totalorder %s115, 0
      %s118 = sadd.s32 %s117, 1
      %s119 = scalar_select %p116, %s117, %s118
      %p122 = pneg %p116
      %p123 = scmp.eq.s32.totalorder %s23, 1
      %p124 = por %p122, %p123
      %p125 = scmp.ne.s32.totalorder %s117, %s120
      %p126 = scmp.eq.s32.totalorder %s23, 0
      %p127 = por %p125, %p126
      %p128 = scmp.ne.s32.totalorder %s117, %s120
      %p129 = scmp.eq.s32.totalorder %s28, 1
      %p130 = por %p128, %p129
      %p131 = scmp.ne.s32.totalorder %s120, %s121
      %p132 = scmp.eq.s32.totalorder %s28, 0
      %p133 = por %p131, %p132
      %p134 = scmp.ne.s32.totalorder %s120, %s121
      %p135 = scmp.eq.s32.totalorder %s29, 1
      %p136 = por %p134, %p135
      %p138 = scmp.ne.s32.totalorder %s121, %s137
      %p139 = scmp.eq.s32.totalorder %s29, 0
      %p140 = por %p138, %p139
      %s141 = ssub.s32 %s30, %s42
      %s142 = ssub.s32 %s31, %s38
      %s143 = sor.u32 %s141, %s142
      %p144 = scmp.eq.s32.totalorder %s143, 0
      %s146 = sadd.s32 %s145, 1
      %s147 = scalar_select %p144, %s145, %s146
      %p150 = pneg %p144
      %p151 = scmp.eq.s32.totalorder %s23, 1
      %p152 = por %p150, %p151
      %p153 = scmp.ne.s32.totalorder %s145, %s148
      %p154 = scmp.eq.s32.totalorder %s23, 0
      %p155 = por %p153, %p154
      %p156 = scmp.ne.s32.totalorder %s145, %s148
      %p157 = scmp.eq.s32.totalorder %s28, 1
      %p158 = por %p156, %p157
      %p159 = scmp.ne.s32.totalorder %s148, %s149
      %p160 = scmp.eq.s32.totalorder %s28, 0
      %p161 = por %p159, %p160
      %p162 = scmp.ne.s32.totalorder %s148, %s149
      %p163 = scmp.eq.s32.totalorder %s29, 1
      %p164 = por %p162, %p163
      %p166 = scmp.ne.s32.totalorder %s149, %s165
      %p167 = scmp.eq.s32.totalorder %s29, 0
      %p168 = por %p166, %p167
      %s169 = ssub.s32 %s30, %s42
      %s170 = ssub.s32 %s31, %s38
      %s171 = sor.u32 %s169, %s170
      %p172 = scmp.eq.s32.totalorder %s171, 0
      %s174 = sadd.s32 %s173, 1
      %s175 = scalar_select %p172, %s173, %s174
      %p178 = pneg %p172
      %p179 = scmp.eq.s32.totalorder %s23, 1
      %p180 = por %p178, %p179
      %p181 = scmp.ne.s32.totalorder %s173, %s176
      %p182 = scmp.eq.s32.totalorder %s23, 0
      %p183 = por %p181, %p182
      %p184 = scmp.ne.s32.totalorder %s173, %s176
      %p185 = scmp.eq.s32.totalorder %s28, 1
      %p186 = por %p184, %p185
      %p187 = scmp.ne.s32.totalorder %s176, %s177
      %p188 = scmp.eq.s32.totalorder %s28, 0
      %p189 = por %p187, %p188
      %p190 = scmp.ne.s32.totalorder %s176, %s177
      %p191 = scmp.eq.s32.totalorder %s29, 1
      %p192 = por %p190, %p191
      %p194 = scmp.ne.s32.totalorder %s177, %s193
      %p195 = scmp.eq.s32.totalorder %s29, 0
      %p196 = por %p194, %p195
      %p197 = scmp.le.s32.totalorder 1, %s23
      %p198 = scmp.lt.s32.totalorder %s23, 3
      %p199 = pnand %p197, %p198
      %p200 = pneg %p199
      // Predicated region
      $region9: #{tpu_custom_call.1} parent=5 // pred_check
        _
      $region10: #{tpu_custom_call.1} parent=5 // pred_check_branch
        %202 = sbr.rel (%p199) target = $region12
      $region11: #{tpu_custom_call.1} parent=5 // pred_region
        %s203 = ssub.s32 %s23, 1
        // Predicated region
        $region13: #{tpu_custom_call.1} parent=11 // pred_check
          %p204 = pneg %p56
        $region14: #{tpu_custom_call.1} parent=11 // pred_check_branch
          %206 = sbr.rel (%p204) target = $region16
        $region15: #{tpu_custom_call.1} parent=11 // pred_region
          %s208 = ssub.s32 16, 16
          %209 = vsyncadd [#allocation5], %s208
          %212 = dma.hbm_to_smem %s0, 16, [#allocation2], [#allocation5]
        $region16: #{tpu_custom_call.1} parent=11 // pred_fallthru
          _
        // Predicated region
        $region17: #{tpu_custom_call.1} parent=11 // pred_check
          %p213 = pneg %p77
        $region18: #{tpu_custom_call.1} parent=11 // pred_check_branch
          %215 = sbr.rel (%p213) target = $region20
        $region19: #{tpu_custom_call.1} parent=11 // pred_region
          %s217 = ssub.s32 32, 32
          %218 = vsyncadd [#allocation6], %s217
          %s220 = sshll.u32 %s1, 4
          %s221 = int_to_ptr.vmem [resolvable:$true] %s220
          %223 = dma.vmem_to_smem %s221, 32, [#allocation7], [#allocation6]
        $region20: #{tpu_custom_call.1} parent=11 // pred_fallthru
          _
      $region12: #{tpu_custom_call.1} parent=5 // pred_fallthru
        _
      %p224 = scmp.lt.s32.totalorder %s23, 2
      // Predicated region
      $region21: #{tpu_custom_call.1} parent=5 // pred_check
        %p225 = pneg %p224
      $region22: #{tpu_custom_call.1} parent=5 // pred_check_branch
        %227 = sbr.rel (%p225) target = $region24
      $region23: #{tpu_custom_call.1} parent=5 // pred_region
        // Predicated region
        $region25: #{tpu_custom_call.1} parent=23 // pred_check
          %p228 = pneg %p99
        $region26: #{tpu_custom_call.1} parent=23 // pred_check_branch
          %230 = sbr.rel (%p228) target = $region28
        $region27: #{tpu_custom_call.1} parent=23 // pred_region
          %s231 = sand.u32 %s89, 1
          %s232 = scalar_lea.sflag [#allocation3], %s231
          %s233 = sand.u32 %s89, 1
          %s234 = smul.addr %s233, 24
          %s235 = scalar_lea.vmem [#allocation8], %s234
          %s237 = ssub.s32 384, 384
          %238 = vsyncadd %s232, %s237
          %s239 = smul.addr %s30, 3
          %s240 = sadd.s32 %s31, %s239
          %s241 = smul.addr %s240, 128
          %s242 = scalar_lea.hbm %s2, %s241
          %s243 = sshll.u32 %s235, 4
          %s244 = int_to_ptr.vmem [resolvable:$true] %s243
          %249 = dma.hbm_to_vmem [thread:$0]  %s242, 384, %s244, %s232, 128, 128, 8
        $region28: #{tpu_custom_call.1} parent=23 // pred_fallthru
          _
      $region24: #{tpu_custom_call.1} parent=5 // pred_fallthru
        _
      %p250 = scmp.le.s32.totalorder 1, %s23
      %p251 = scmp.lt.s32.totalorder %s23, 3
      %p252 = pnand %p250, %p251
      %p253 = pneg %p252
      // Predicated region
      $region29: #{tpu_custom_call.1} parent=5 // pred_check
        _
      $region30: #{tpu_custom_call.1} parent=5 // pred_check_branch
        %255 = sbr.rel (%p252) target = $region32
      $region31: #{tpu_custom_call.1} parent=5 // pred_region
        %s256 = ssub.s32 %s23, 1
        // Predicated region
        $region33: #{tpu_custom_call.1} parent=31 // pred_check
          %p257 = pneg %p56
        $region34: #{tpu_custom_call.1} parent=31 // pred_check_branch
          %259 = sbr.rel (%p257) target = $region36
        $region35: #{tpu_custom_call.1} parent=31 // pred_region
          %260 = dma.done [#allocation5], 16
        $region36: #{tpu_custom_call.1} parent=31 // pred_fallthru
          _
        // Predicated region
        $region37: #{tpu_custom_call.1} parent=31 // pred_check
          %p261 = pneg %p77
        $region38: #{tpu_custom_call.1} parent=31 // pred_check_branch
          %263 = sbr.rel (%p261) target = $region40
        $region39: #{tpu_custom_call.1} parent=31 // pred_region
          %264 = dma.done [#allocation6], 32
        $region40: #{tpu_custom_call.1} parent=31 // pred_fallthru
          _
        %s265 = sand.u32 %s92, 1
        %s266 = scalar_lea.sflag [#allocation3], %s265
        %s267 = sand.u32 %s92, 1
        %s268 = smul.addr %s267, 24
        %s269 = scalar_lea.vmem [#allocation8], %s268
        // Predicated region
        $region41: #{tpu_custom_call.1} parent=31 // pred_check
          %p270 = pneg %p105
        $region42: #{tpu_custom_call.1} parent=31 // pred_check_branch
          %272 = sbr.rel (%p270) target = $region44
        $region43: #{tpu_custom_call.1} parent=31 // pred_region
          %273 = dma.done %s266, 384
        $region44: #{tpu_custom_call.1} parent=31 // pred_fallthru
          _
        %274 = sfence
        %p275 = pneg %p56
        %p276 = pneg %p53
        %p277 = pneg %p77
        %p278 = pneg %p74
        %s279 = sand.u32 %s92, 1
        %s280 = scalar_lea.sflag [#allocation3], %s279
        %s281 = sand.u32 %s92, 1
        %s282 = smul.addr %s281, 24
        %s283 = scalar_lea.vmem [#allocation8], %s282
        %p284 = pneg %p105
        %p285 = pneg %p102
        %p286 = pneg %p133
        %p287 = pneg %p130
        %s288 = sand.u32 %s120, 1
        %s289 = scalar_lea.sflag [#allocation4], %s288
        %s290 = sand.u32 %s120, 1
        %s291 = smul.addr %s290, 8
        %s292 = scalar_lea.vmem [#allocation9], %s291
        %p293 = pneg %p161
        %p294 = pneg %p158
        %s295 = sand.u32 %s28, 1
        %s296 = scalar_lea.sflag [#allocation11], %s295
        %s297 = sand.u32 %s148, 1
        %s298 = smul.addr %s297, 8
        %s299 = scalar_lea.vmem [#allocation10], %s298
        %p300 = pneg %p189
        %p301 = pneg %p186
        %s302 = sand.u32 %s28, 1
        %s303 = scalar_lea.sflag [#allocation11], %s302
        %s304 = sand.u32 %s176, 1
        %s305 = smul.addr %s304, 8
        %s306 = scalar_lea.vmem [#allocation12], %s305
        %s307 = sld [smem:[#allocation2 + $0x6]]
        %v308 = vstv %s307
        %s309 = sld [smem:[#allocation2 + $0x7]]
        %s310 = smul.u32 %s32, 128
        %s311 = sld [smem:[#allocation7 + %s310]]
        %s312 = sadd.f32 %s309, %s311
        %v313 = vstv %s312
        %v314 = vld [vmem:[%s269] sm:$0xff]
        %s315 = sld [smem:[#allocation2]]
        %v316 = vstv %s315
        %v317 = vmul.f32 %v316, %v314
        %v318 = vadd.f32 %v308, %v317
        %s319 = sld [smem:[#allocation2 + $0x3]]
        %v320 = vstv %s319
        %v321 = vmul.f32 %v320, %v314
        %v322 = vadd.f32 %v313, %v321
        %s323 = scalar_lea.vmem %s269, 8 [#allocation8]
        %v324 = vld [vmem:[%s323] sm:$0xff]
        %s325 = sld [smem:[#allocation2 + $0x1]]
        %v326 = vstv %s325
        %v327 = vmul.f32 %v326, %v324
        %v328 = vadd.f32 %v318, %v327
        %s329 = sld [smem:[#allocation2 + $0x4]]
        %v330 = vstv %s329
        %v331 = vmul.f32 %v330, %v324
        %v332 = vadd.f32 %v322, %v331
        %s333 = scalar_lea.vmem %s269, 16 [#allocation8]
        %v334 = vld [vmem:[%s333] sm:$0xff]
        %s335 = sld [smem:[#allocation2 + $0x2]]
        %v336 = vstv %s335
        %v337 = vmul.f32 %v336, %v334
        %v338 = vadd.f32 %v328, %v337
        %s339 = sld [smem:[#allocation2 + $0x5]]
        %v340 = vstv %s339
        %v341 = vmul.f32 %v340, %v334
        %v342 = vadd.f32 %v332, %v341
        %v343 = vxor.u32 %v338, 2147483648
        %v344 = vmul.f32 %v343, 1.442695
        %v345 = vpow.pop %v344
        %v346 = vadd.f32 %v345, 1.0
        %v347 = vrcp.pop %v346
        %v348 = vmul.f32 1.0, %v347
        %v349 = vxor.u32 %v342, 2147483648
        %v350 = vmul.f32 %v349, 1.442695
        %v351 = vpow.pop %v350
        %v352 = vadd.f32 %v351, 1.0
        %v353 = vrcp.pop %v352
        %v354 = vmul.f32 1.0, %v353
        %s355 = sadd.s32 %s310, 1
        %s356 = sld [smem:[#allocation7 + %s355]]
        %v357 = vstv %s356
        %v358 = vmul.f32 %v354, %v357
        %v359 = vsub.f32 1.0, %v354
        %v360 = vmul.f32 %v359, %v348
        %v361 = vadd.f32 %v358, %v360
        %v362 = vmul.f32 %v348, 10.0
        %363 = vst [vmem:[%s292] sm:$0xff] %v362
        %v364 = vmul.f32 %v361, 10.0
        %365 = vst [vmem:[%s299] sm:$0xff] %v364
        %366 = vst [vmem:[%s306] sm:$0xff] %v354
        %s367 = sand.u32 %s120, 1
        %s368 = scalar_lea.sflag [#allocation4], %s367
        %s369 = sand.u32 %s120, 1
        %s370 = smul.addr %s369, 8
        %s371 = scalar_lea.vmem [#allocation9], %s370
        %s372 = sand.u32 %s28, 1
        %s373 = scalar_lea.sflag [#allocation11], %s372
        %s374 = sand.u32 %s148, 1
        %s375 = smul.addr %s374, 8
        %s376 = scalar_lea.vmem [#allocation10], %s375
        %s377 = sand.u32 %s28, 1
        %s378 = scalar_lea.sflag [#allocation11], %s377
        %s379 = sand.u32 %s176, 1
        %s380 = smul.addr %s379, 8
        %s381 = scalar_lea.vmem [#allocation12], %s380
        // Predicated region
        $region45: #{tpu_custom_call.1} parent=31 // pred_check
          %p382 = pneg %p130
        $region46: #{tpu_custom_call.1} parent=31 // pred_check_branch
          %384 = sbr.rel (%p382) target = $region48
        $region47: #{tpu_custom_call.1} parent=31 // pred_region
          %s386 = ssub.s32 128, 128
          %387 = vsyncadd %s368, %s386
          %s388 = sadd.s32 %s33, %s32
          %s389 = smul.addr %s388, 128
          %s390 = scalar_lea.hbm %s3, %s389
          %s392 = sshll.u32 %s371, 4
          %s393 = int_to_ptr.vmem [resolvable:$true] %s392
          %395 = dma.vmem_to_hbm [thread:$0]  %s393, 128, %s390, %s368
        $region48: #{tpu_custom_call.1} parent=31 // pred_fallthru
          _
        // Predicated region
        $region49: #{tpu_custom_call.1} parent=31 // pred_check
          %p396 = pneg %p158
        $region50: #{tpu_custom_call.1} parent=31 // pred_check_branch
          %398 = sbr.rel (%p396) target = $region52
        $region51: #{tpu_custom_call.1} parent=31 // pred_region
          %s400 = ssub.s32 128, 128
          %401 = vsyncadd %s373, %s400
          %s402 = sadd.s32 %s33, %s32
          %s403 = smul.addr %s402, 128
          %s404 = scalar_lea.hbm %s4, %s403
          %s406 = sshll.u32 %s376, 4
          %s407 = int_to_ptr.vmem [resolvable:$true] %s406
          %409 = dma.vmem_to_hbm [thread:$0]  %s407, 128, %s404, %s373
        $region52: #{tpu_custom_call.1} parent=31 // pred_fallthru
          _
        // Predicated region
        $region53: #{tpu_custom_call.1} parent=31 // pred_check
          %p410 = pneg %p186
        $region54: #{tpu_custom_call.1} parent=31 // pred_check_branch
          %412 = sbr.rel (%p410) target = $region56
        $region55: #{tpu_custom_call.1} parent=31 // pred_region
          %s414 = ssub.s32 128, 128
          %415 = vsyncadd %s378, %s414
          %s416 = sadd.s32 %s33, %s32
          %s417 = smul.addr %s416, 128
          %s418 = scalar_lea.hbm %s5, %s417
          %s420 = sshll.u32 %s381, 4
          %s421 = int_to_ptr.vmem [resolvable:$true] %s420
          %423 = dma.vmem_to_hbm [thread:$0]  %s421, 128, %s418, %s378
        $region56: #{tpu_custom_call.1} parent=31 // pred_fallthru
          _
      $region32: #{tpu_custom_call.1} parent=5 // pred_fallthru
        _
      %p424 = scmp.le.s32.totalorder 2, %s23
      // Predicated region
      $region57: #{tpu_custom_call.1} parent=5 // pred_check
        %p425 = pneg %p424
      $region58: #{tpu_custom_call.1} parent=5 // pred_check_branch
        %427 = sbr.rel (%p425) target = $region60
      $region59: #{tpu_custom_call.1} parent=5 // pred_region
        %s428 = ssub.s32 %s23, 2
        // Predicated region
        $region61: #{tpu_custom_call.1} parent=59 // pred_check
          %p429 = pneg %p136
        $region62: #{tpu_custom_call.1} parent=59 // pred_check_branch
          %431 = sbr.rel (%p429) target = $region64
        $region63: #{tpu_custom_call.1} parent=59 // pred_region
          %s432 = sand.u32 %s121, 1
          %s433 = scalar_lea.sflag [#allocation4], %s432
          %s434 = sand.u32 %s121, 1
          %s435 = smul.addr %s434, 8
          %s436 = scalar_lea.vmem [#allocation9], %s435
          %437 = dma.done %s433, 128
        $region64: #{tpu_custom_call.1} parent=59 // pred_fallthru
          _
        // Predicated region
        $region65: #{tpu_custom_call.1} parent=59 // pred_check
          %p438 = pneg %p164
        $region66: #{tpu_custom_call.1} parent=59 // pred_check_branch
          %440 = sbr.rel (%p438) target = $region68
        $region67: #{tpu_custom_call.1} parent=59 // pred_region
          %s441 = sand.u32 %s29, 1
          %s442 = scalar_lea.sflag [#allocation11], %s441
          %s443 = sand.u32 %s149, 1
          %s444 = smul.addr %s443, 8
          %s445 = scalar_lea.vmem [#allocation10], %s444
          %446 = dma.done %s442, 128
        $region68: #{tpu_custom_call.1} parent=59 // pred_fallthru
          _
        // Predicated region
        $region69: #{tpu_custom_call.1} parent=59 // pred_check
          %p447 = pneg %p192
        $region70: #{tpu_custom_call.1} parent=59 // pred_check_branch
          %449 = sbr.rel (%p447) target = $region72
        $region71: #{tpu_custom_call.1} parent=59 // pred_region
          %s450 = sand.u32 %s29, 1
          %s451 = scalar_lea.sflag [#allocation11], %s450
          %s452 = sand.u32 %s177, 1
          %s453 = smul.addr %s452, 8
          %s454 = scalar_lea.vmem [#allocation12], %s453
          %455 = dma.done %s451, 128
        $region72: #{tpu_custom_call.1} parent=59 // pred_fallthru
          _
      $region60: #{tpu_custom_call.1} parent=5 // pred_fallthru
        _
    $region6: #{tpu_custom_call.1} parent=1 // loop_footer
      %s27 = sadd.s32 1, %s23
    $region7: #{tpu_custom_call.1} parent=1 // loop_footer_branch
      %22 = sbr.rel target = $region3
    $region8: #{tpu_custom_call.1} parent=1 // loop_exit
      _
    %456 = vsyncpa [#allocation3], 1
    %s457 = scalar_lea.sflag [#allocation3], 1
    %458 = vsyncpa %s457, 1
    %459 = vsyncpa [#allocation4], 1
    %s460 = scalar_lea.sflag [#allocation4], 1
    %461 = vsyncpa %s460, 1
    %462 = vsyncpa [#allocation11], 1
    %s463 = scalar_lea.sflag [#allocation11], 1
    %464 = vsyncpa %s463, 1
    %465 = vsyncpa [#allocation5], 1
    %s466 = scalar_lea.sflag [#allocation5], 1
    %467 = vsyncpa %s466, 1
    %468 = vsyncpa [#allocation6], 1
    %s469 = scalar_lea.sflag [#allocation6], 1
    %470 = vsyncpa %s469, 1

</llo_original>
